<compile_context>
chip_gen: v6e
topology: v6e:2x2x1
jax: 0.10.0
libtpu: 0.0.40
codegen_flags: <defaults>
</compile_context>

<pallas_src>
import math

import jax
import jax.numpy as jnp
from jax.experimental import pallas as pl
from jax.experimental.pallas import tpu as pltpu

_LANE = 128            # vreg lane width
_SUBLANE = 8           # f32 sublane packing for the batch (second-to-last) dim
_MAX_TB = 1024         # batch-tile cap (>=512 rows is already ~85% of HBM roofline)
_VMEM_BUDGET = 24 << 20   # budget used to derive TB (safe on v5e/v6e/v7x)
_VMEM_CEIL = 48 << 20     # hard ceiling for vmem_limit_bytes (under v7x's 64 MiB/TC)


def _round_up(n, m):
    return ((n + m - 1) // m) * m


def _choose_tb(batch, per_row_bytes, weight_bytes):
    """Pick a batch tile: fit the VMEM budget, keep >=2 tiles when batch allows."""
    avail = _VMEM_BUDGET - weight_bytes
    tb = avail // max(per_row_bytes, 1)
    tb = max(_SUBLANE, min(_MAX_TB, int(tb)))
    if batch >= 2 * _SUBLANE:
        # at least two grid tiles so v7x's two TensorCores both get work and the
        # DMA/compute pipeline has something to overlap.
        tb = min(tb, _round_up(-(-batch // 2), _SUBLANE))
    tb = min(tb, _round_up(batch, _SUBLANE))
    tb = max(_SUBLANE, (tb // _SUBLANE) * _SUBLANE)
    return tb


def _vmem_limit(bytes_needed):
    return int(min(_VMEM_CEIL, max(8 << 20, bytes_needed * 3 // 2 + (2 << 20))))


# ----------------------------- Pallas kernels ------------------------------ #

def _reg_linear_kernel(x_ref, w_ref, b_ref, o_ref):
    # x:(TB, Din) input dtype; w:(Din, O) compute dtype; b:(1, O) f32 -> o:(TB, O)
    x = x_ref[...].astype(w_ref.dtype)                       # in-kernel cast (VPU, free)
    y = jnp.dot(x, w_ref[...], preferred_element_type=jnp.float32) + b_ref[...]
    o_ref[...] = y.astype(o_ref.dtype)


def _reg_nonlinear_bd_kernel(x_ref, w1_ref, b1_ref, w2_ref, b2_ref, o_ref):
    # Packed (o*H+h) hidden layout; second layer = block-diagonal MXU matmul.
    # x:(TB, Din)  w1:(Din, OH_pad)  b1:(1, OH_pad) f32
    # w2:(OH_pad, O) block-diag      b2:(1, O) f32   ->  o:(TB, O)
    x = x_ref[...].astype(w1_ref.dtype)
    h = jnp.dot(x, w1_ref[...], preferred_element_type=jnp.float32) + b1_ref[...]
    h = jnp.maximum(h, 0.0)
    y = jnp.dot(h.astype(w2_ref.dtype), w2_ref[...],
                preferred_element_type=jnp.float32) + b2_ref[...]
    o_ref[...] = y.astype(o_ref.dtype)


def _make_nonlinear_vpu_kernel(n_hidden, o128, out_dim):
    # H-major / O-minor(128-lane) hidden layout; second layer = VPU multiply-reduce,
    # no block-diagonal weight at all.
    def kernel(x_ref, w1_ref, b1_ref, w2_ref, b2_ref, o_ref):
        # x:(TB, Din)  w1:(Din, H*o128)  b1:(1, H*o128) f32
        # w2:(1, H*o128) f32             b2:(1, out_dim) f32  ->  o:(TB, out_dim)
        x = x_ref[...].astype(w1_ref.dtype)
        h = jnp.dot(x, w1_ref[...], preferred_element_type=jnp.float32) + b1_ref[...]
        h = jnp.maximum(h, 0.0)
        acc = jnp.zeros((h.shape[0], o128), jnp.float32)
        for hh in range(n_hidden):                            # static unrolled FMAs
            sl = slice(hh * o128, (hh + 1) * o128)            # lane-aligned static slice
            acc = acc + h[:, sl] * w2_ref[:, sl]
        y = acc[:, :out_dim] + b2_ref[...]
        o_ref[...] = y.astype(o_ref.dtype)
    return kernel


# ----------------------- one-time parameter preparation --------------------- #

def prepare_linear_params(w_all, b_all, compute_dtype=None):
    """w_all:(O, Din) (torch Linear layout), b_all:(O,) -> fused (Din,O) weight + bias."""
    O, Din = w_all.shape
    dt = compute_dtype if compute_dtype is not None else w_all.dtype
    w_t = jnp.transpose(w_all).astype(dt)                     # (Din, O)
    b = b_all.reshape(1, O).astype(jnp.float32)
    return w_t, b


def prepare_nonlinear_params(w1_all, b1_all, w2_all, b2_all, compute_dtype=None):
    """w1:(O, H, Din), b1:(O, H), w2:(O, H), b2:(O,) -> fused params (+ layout choice)."""
    O, H, Din = w1_all.shape
    dt = compute_dtype if compute_dtype is not None else w1_all.dtype
    o128 = _round_up(O, _LANE)
    oh = O * H
    oh_pad = _round_up(oh, _LANE)

    # MXU work per batch row of each formulation: pick the cheaper one.
    cost_vpu = Din * (H * o128)
    cost_bd = Din * oh_pad + oh_pad * o128
    b2 = b2_all.reshape(1, O).astype(jnp.float32)

    if cost_vpu <= cost_bd:
        # VPU path: column c = h*o128 + o  (H-major, O-minor, lane-padded to 128).
        cols = H * o128
        w1_dho = jnp.transpose(w1_all, (2, 1, 0)).astype(dt)              # (Din, H, O)
        w1_t = jnp.zeros((Din, H, o128), dt).at[:, :, :O].set(w1_dho).reshape(Din, cols)
        b1 = (jnp.zeros((1, H, o128), jnp.float32)
              .at[0, :, :O].set(jnp.transpose(b1_all).astype(jnp.float32))
              .reshape(1, cols))
        w2v = (jnp.zeros((1, H, o128), jnp.float32)
               .at[0, :, :O].set(jnp.transpose(w2_all).astype(jnp.float32))
               .reshape(1, cols))
        return ("vpu", H, o128, O, (w1_t, b1, w2v, b2))

    # Block-diag path: column c = o*H + h (packed), small (oh_pad, O) second layer.
    w1_t = jnp.zeros((Din, oh_pad), dt).at[:, :oh].set(
        jnp.transpose(w1_all.reshape(oh, Din)).astype(dt))
    b1 = jnp.zeros((1, oh_pad), jnp.float32).at[0, :oh].set(
        b1_all.reshape(oh).astype(jnp.float32))
    eye_oh = jnp.repeat(jnp.eye(O, dtype=jnp.float32), H, axis=0)          # (O*H, O)
    w2_bd = (eye_oh * w2_all.reshape(oh, 1).astype(jnp.float32)).astype(dt)
    w2_p = jnp.zeros((oh_pad, O), dt).at[:oh, :].set(w2_bd)
    return ("blockdiag", H, O, O, (w1_t, b1, w2_p, b2))


# ------------------------------- forwards ----------------------------------- #

def reg_forward_linear(x, fused_params):
    """x:(B, Din), fused_params from prepare_linear_params -> (B, out_dim)."""
    w_t, b = fused_params
    B, Din = x.shape
    O = w_t.shape[1]
    x_item = x.dtype.itemsize
    weight_bytes = int(w_t.size) * w_t.dtype.itemsize + int(b.size) * 4
    per_row = 2 * Din * x_item + 2 * O * x_item               # double-buffered x + out
    tb = _choose_tb(B, per_row, weight_bytes)
    grid = (pl.cdiv(B, tb),)
    vmem_limit = _vmem_limit(tb * per_row + weight_bytes)

    cost = pl.CostEstimate(
        flops=2 * B * Din * O, transcendentals=0,
        bytes_accessed=int(x.size) * x_item + weight_bytes + B * O * x_item)

    return pl.pallas_call(
        _reg_linear_kernel,
        out_shape=jax.ShapeDtypeStruct((B, O), x.dtype),
        grid_spec=pltpu.PrefetchScalarGridSpec(
            num_scalar_prefetch=0,
            grid=grid,
            in_specs=[
                pl.BlockSpec((tb, Din), lambda i: (i, 0)),                 # streamed x
                pl.BlockSpec((Din, O), lambda i: (0, 0),
                             pipeline_mode=pl.Buffered(1)),                # resident w
                pl.BlockSpec((1, O), lambda i: (0, 0),
                             pipeline_mode=pl.Buffered(1)),                # resident b
            ],
            out_specs=pl.BlockSpec((tb, O), lambda i: (i, 0)),             # un-padded out
        ),
        compiler_params=pltpu.CompilerParams(
            dimension_semantics=("parallel",),
            vmem_limit_bytes=vmem_limit),
        cost_estimate=cost,
    )(x, w_t, b)


def reg_forward_nonlinear(x, fused_params):
    """x:(B, Din), fused_params from prepare_nonlinear_params -> (B, out_dim)."""
    mode, hidden, o128, out_dim, params = fused_params
    w1_t, b1, w2, b2 = params
    B, Din = x.shape
    cols1 = w1_t.shape[1]
    x_item = x.dtype.itemsize
    weight_bytes = (int(w1_t.size) * w1_t.dtype.itemsize + int(b1.size) * 4
                    + int(w2.size) * w2.dtype.itemsize + int(b2.size) * 4)
    # double-buffered x + out rows, plus the f32 hidden intermediate per row
    per_row = 2 * Din * x_item + 2 * out_dim * x_item + cols1 * 4
    tb = _choose_tb(B, per_row, weight_bytes)
    grid = (pl.cdiv(B, tb),)
    vmem_limit = _vmem_limit(tb * per_row + weight_bytes)

    if mode == "vpu":
        kernel = _make_nonlinear_vpu_kernel(hidden, o128, out_dim)
        flops2 = 2 * B * hidden * o128
    else:
        kernel = _reg_nonlinear_bd_kernel
        flops2 = 2 * B * cols1 * out_dim

    cost = pl.CostEstimate(
        flops=2 * B * Din * cols1 + flops2, transcendentals=0,
        bytes_accessed=int(x.size) * x_item + weight_bytes + B * out_dim * x_item)

    return pl.pallas_call(
        kernel,
        out_shape=jax.ShapeDtypeStruct((B, out_dim), x.dtype),
        grid_spec=pltpu.PrefetchScalarGridSpec(
            num_scalar_prefetch=0,
            grid=grid,
            in_specs=[
                pl.BlockSpec((tb, Din), lambda i: (i, 0)),                 # streamed x
                pl.BlockSpec((Din, cols1), lambda i: (0, 0),
                             pipeline_mode=pl.Buffered(1)),                # resident w1
                pl.BlockSpec((1, cols1), lambda i: (0, 0),
                             pipeline_mode=pl.Buffered(1)),                # resident b1
                pl.BlockSpec(w2.shape, lambda i: (0, 0),
                             pipeline_mode=pl.Buffered(1)),                # resident w2
                pl.BlockSpec((1, out_dim), lambda i: (0, 0),
                             pipeline_mode=pl.Buffered(1)),                # resident b2
            ],
            out_specs=pl.BlockSpec((tb, out_dim), lambda i: (i, 0)),       # un-padded out
        ),
        compiler_params=pltpu.CompilerParams(
            dimension_semantics=("parallel",),
            vmem_limit_bytes=vmem_limit),
        cost_estimate=cost,
    )(x, w1_t, b1, w2, b2)


# --------------------------- reference (pure JAX) --------------------------- #

def ref_linear(x, w_all, b_all):
    return jnp.dot(x, w_all.T, precision=jax.lax.Precision.HIGHEST) + b_all[None, :]


def ref_nonlinear(x, w1_all, b1_all, w2_all, b2_all):
    h = jnp.einsum("bd,ohd->boh", x, w1_all,
                   precision=jax.lax.Precision.HIGHEST) + b1_all[None]
    h = jnp.maximum(h, 0.0)
    return jnp.einsum("boh,oh->bo", h, w2_all,
                      precision=jax.lax.Precision.HIGHEST) + b2_all[None, :]


# ------------------------------ demo / checks ------------------------------- #

def _uniform(key, shape, fan_in, dtype):
    bound = 1.0 / math.sqrt(fan_in)
    return jax.random.uniform(key, shape, dtype=dtype, minval=-bound, maxval=bound)


if __name__ == "__main__":
    dtype = jnp.float32
    key = jax.random.PRNGKey(0)
    ks = jax.random.split(key, 16)

    # --- case A: small out_dim (block-diag second layer chosen automatically) ---
    in_dim, hidden, out_dim = 32, 16, 4
    w_lin = _uniform(ks[0], (out_dim, in_dim), in_dim, dtype)
    b_lin = _uniform(ks[1], (out_dim,), in_dim, dtype)
    w1 = _uniform(ks[2], (out_dim, hidden, in_dim), in_dim, dtype)
    b1 = _uniform(ks[3], (out_dim, hidden), in_dim, dtype)
    w2 = _uniform(ks[4], (out_dim, hidden), hidden, dtype)
    b2 = _uniform(ks[5], (out_dim,), hidden, dtype)

    fused_lin = prepare_linear_params(w_lin, b_lin)
    fused_nl = prepare_nonlinear_params(w1, b1, w2, b2)
    assert fused_nl[0] == "blockdiag"

    for batch in (16, 13):   # 16 -> two full tiles (2 TCs on v7x); 13 -> ragged last tile
        x = jax.random.normal(ks[6], (batch, in_dim), dtype=dtype)
        y_lin = jax.block_until_ready(reg_forward_linear(x, fused_lin))
        y_nl = jax.block_until_ready(reg_forward_nonlinear(x, fused_nl))
        assert y_lin.shape == (batch, out_dim) and y_nl.shape == (batch, out_dim)
        assert jnp.allclose(y_lin, ref_linear(x, w_lin, b_lin), atol=2e-4, rtol=2e-4)
        assert jnp.allclose(y_nl, ref_nonlinear(x, w1, b1, w2, b2), atol=2e-4, rtol=2e-4)

    # --- case B: wide out_dim (VPU multiply-reduce second layer chosen) ---
    out_dim2, hidden2 = 128, 8
    w1b = _uniform(ks[7], (out_dim2, hidden2, in_dim), in_dim, dtype)
    b1b = _uniform(ks[8], (out_dim2, hidden2), in_dim, dtype)
    w2b = _uniform(ks[9], (out_dim2, hidden2), hidden2, dtype)
    b2b = _uniform(ks[10], (out_dim2,), hidden2, dtype)
    fused_nl2 = prepare_nonlinear_params(w1b, b1b, w2b, b2b)
    assert fused_nl2[0] == "vpu"

    xb = jax.random.normal(ks[11], (16, in_dim), dtype=dtype)
    y_nl2 = jax.block_until_ready(reg_forward_nonlinear(xb, fused_nl2))
    assert y_nl2.shape == (16, out_dim2)
    assert jnp.allclose(y_nl2, ref_nonlinear(xb, w1b, b1b, w2b, b2b), atol=2e-4, rtol=2e-4)

    print("KERNEL_OK")
</pallas_src>

<mosaic_0001>
module attributes {stable_mosaic.version = 11 : i64} {
  func.func @_reg_linear_kernel(%arg0: i32, %arg1: memref<8x32xf32, #tpu.memory_space<vmem>>, %arg2: memref<32x4xf32, #tpu.memory_space<vmem>>, %arg3: memref<1x4xf32, #tpu.memory_space<vmem>>, %arg4: memref<8x4xf32, #tpu.memory_space<vmem>>) attributes {dimension_semantics = [#tpu.dimension_semantics<parallel>], iteration_bounds = array<i64: 2>, scalar_prefetch = 0 : i64, scratch_operands = 0 : i64, tpu.core_type = #tpu.core_type<tc>, window_params = [{transform_indices = @transform_0, window_bounds = array<i64: 8, 32>}, {pipeline_mode = #tpu.pipeline_mode<synchronous>, transform_indices = @transform_1, window_bounds = array<i64: 32, 4>}, {pipeline_mode = #tpu.pipeline_mode<synchronous>, transform_indices = @transform_2, window_bounds = array<i64: 1, 4>}, {transform_indices = @transform_3, window_bounds = array<i64: 8, 4>}]} {
    %c0 = arith.constant 0 : index
    %c0_0 = arith.constant 0 : index
    %0 = vector.load %arg1[%c0, %c0_0] : memref<8x32xf32, #tpu.memory_space<vmem>>, vector<8x32xf32>
    %c0_1 = arith.constant 0 : index
    %c0_2 = arith.constant 0 : index
    %1 = vector.load %arg2[%c0_1, %c0_2] : memref<32x4xf32, #tpu.memory_space<vmem>>, vector<32x4xf32>
    %cst = arith.constant dense<0.000000e+00> : vector<8x4xf32>
    %2 = tpu.matmul %0, %1, %cst {dimension_numbers = #tpu.dot_dimension_numbers<[1], [0], [0], [1], [0, 0, 1, 1], [], []>} : vector<8x32xf32>, vector<32x4xf32>, vector<8x4xf32> -> vector<8x4xf32>
    %c0_3 = arith.constant 0 : index
    %c0_4 = arith.constant 0 : index
    %3 = vector.load %arg3[%c0_3, %c0_4] : memref<1x4xf32, #tpu.memory_space<vmem>>, vector<1x4xf32>
    %4 = vector.broadcast %3 : vector<1x4xf32> to vector<8x4xf32>
    %5 = arith.addf %2, %4 : vector<8x4xf32>
    %c0_5 = arith.constant 0 : index
    %c0_6 = arith.constant 0 : index
    %6 = vector.load %arg4[%c0_5, %c0_6] : memref<8x4xf32, #tpu.memory_space<vmem>>, vector<8x4xf32>
    tpu.vector_store %arg4[%c0_5, %c0_6], %5 {strides = array<i32>} : memref<8x4xf32, #tpu.memory_space<vmem>>, vector<8x4xf32>,
    return
  }
  func.func @transform_0(%arg0: i32) -> (i32, i32) {
    %c0_i32 = arith.constant 0 : i32
    %c0_i32_0 = arith.constant 0 : i32
    return %arg0, %c0_i32 : i32, i32
  }
  func.func @transform_1(%arg0: i32) -> (i32, i32) {
    %c0_i32 = arith.constant 0 : i32
    %c0_i32_0 = arith.constant 0 : i32
    %c0_i32_1 = arith.constant 0 : i32
    return %c0_i32, %c0_i32_0 : i32, i32
  }
  func.func @transform_2(%arg0: i32) -> (i32, i32) {
    %c0_i32 = arith.constant 0 : i32
    %c0_i32_0 = arith.constant 0 : i32
    %c0_i32_1 = arith.constant 0 : i32
    return %c0_i32, %c0_i32_0 : i32, i32
  }
  func.func @transform_3(%arg0: i32) -> (i32, i32) {
    %c0_i32 = arith.constant 0 : i32
    %c0_i32_0 = arith.constant 0 : i32
    return %arg0, %c0_i32 : i32, i32
  }
}

</mosaic_0001>

<llo_original>
// kernel: tpu_custom_call.1
$region0: #{tpu_custom_call.1}
  #allocation0 [shape = 'u32[]', space=smem, size = 0x4, offset = 0x4, fixed_abs, tag = 'smem constant byte address 0x4 - core index']
  #allocation1 [shape = 'u32[144,128]{1,0:T(1,128)}', space=vmem, size = 0x12000, scoped, tag = 'internal scratch']
  %s0 = inlined_call_operand.vmem [shape: f32[16,32], index: 0, kind: input, shape index: {}]
  %s1 = inlined_call_operand.vmem [shape: f32[32,4], index: 1, kind: input, shape index: {}]
  %s2 = inlined_call_operand.vmem [shape: f32[1,4], index: 2, kind: input, shape index: {}]
  %s3 = inlined_call_operand.vmem [shape: f32[16,4], index: 3, kind: output, shape index: {}]
  %s4 = sld [smem:[#allocation0]]
  $region45: #{tpu_custom_call.1} parent=0
    _
  %s6 = ssub.s32 1, %s4
  %s7 = scalar_select 0, %s6, %s4
  loop: start=0, step=1, limit=4
  $region2: #{tpu_custom_call.1} parent=0 // loop_pre_header
    _
  $region3: #{tpu_custom_call.1} parent=0 // loop_header
    %s9 = sphi 0, %s13
    %p10 = scmp.ge.s32.totalorder %s9, 4
    %s19 = sphi 0, %s21
    %s22 = sphi 0, %s19
    %s23 = sphi 0, %s22
    %s39 = sphi 0, %s23
    %s43 = sphi 0, %s43
    %s45 = sphi 0, %s43
    %s46 = sphi 0, %s45
    %s60 = sphi 0, %s46
    %s64 = sphi 0, %s64
    %s66 = sphi 0, %s64
    %s67 = sphi 0, %s66
    %s81 = sphi 0, %s67
    %s87 = sphi 0, %s89
    %s90 = sphi 0, %s87
    %s91 = sphi 0, %s90
    %s107 = sphi 0, %s91
  $region4: #{tpu_custom_call.1} parent=0 // loop_header_branch
    %12 = sbr.rel (%p10) target = $region8
  $region5: #{tpu_custom_call.1} parent=0 // loop_body
    %s14 = ssub.s32 %s9, 1
    %s15 = ssub.s32 %s9, 2
    %s16 = sadd.s32 %s9, 1
    %s17 = ssub.s32 %s9, %s16
    %p18 = scmp.eq.s32.totalorder %s17, 0
    %s20 = sadd.s32 %s19, 1
    %s21 = scalar_select %p18, %s19, %s20
    %p24 = pneg %p18
    %p25 = scmp.eq.s32.totalorder %s9, 1
    %p26 = por %p24, %p25
    %p27 = scmp.ne.s32.totalorder %s19, %s22
    %p28 = scmp.eq.s32.totalorder %s9, 0
    %p29 = por %p27, %p28
    %p30 = scmp.ne.s32.totalorder %s19, %s22
    %p31 = scmp.eq.s32.totalorder %s14, 1
    %p32 = por %p30, %p31
    %p33 = scmp.ne.s32.totalorder %s22, %s23
    %p34 = scmp.eq.s32.totalorder %s14, 0
    %p35 = por %p33, %p34
    %p36 = scmp.ne.s32.totalorder %s22, %s23
    %p37 = scmp.eq.s32.totalorder %s15, 1
    %p38 = por %p36, %p37
    %p40 = scmp.ne.s32.totalorder %s23, %s39
    %p41 = scmp.eq.s32.totalorder %s15, 0
    %p42 = por %p40, %p41
    %s44 = sadd.s32 %s43, 1
    %p47 = scmp.eq.s32.totalorder %s9, 1
    %p48 = scmp.ne.s32.totalorder %s43, %s45
    %p49 = scmp.eq.s32.totalorder %s9, 0
    %p50 = por %p48, %p49
    %p51 = scmp.ne.s32.totalorder %s43, %s45
    %p52 = scmp.eq.s32.totalorder %s14, 1
    %p53 = por %p51, %p52
    %p54 = scmp.ne.s32.totalorder %s45, %s46
    %p55 = scmp.eq.s32.totalorder %s14, 0
    %p56 = por %p54, %p55
    %p57 = scmp.ne.s32.totalorder %s45, %s46
    %p58 = scmp.eq.s32.totalorder %s15, 1
    %p59 = por %p57, %p58
    %p61 = scmp.ne.s32.totalorder %s46, %s60
    %p62 = scmp.eq.s32.totalorder %s15, 0
    %p63 = por %p61, %p62
    %s65 = sadd.s32 %s64, 1
    %p68 = scmp.eq.s32.totalorder %s9, 1
    %p69 = scmp.ne.s32.totalorder %s64, %s66
    %p70 = scmp.eq.s32.totalorder %s9, 0
    %p71 = por %p69, %p70
    %p72 = scmp.ne.s32.totalorder %s64, %s66
    %p73 = scmp.eq.s32.totalorder %s14, 1
    %p74 = por %p72, %p73
    %p75 = scmp.ne.s32.totalorder %s66, %s67
    %p76 = scmp.eq.s32.totalorder %s14, 0
    %p77 = por %p75, %p76
    %p78 = scmp.ne.s32.totalorder %s66, %s67
    %p79 = scmp.eq.s32.totalorder %s15, 1
    %p80 = por %p78, %p79
    %p82 = scmp.ne.s32.totalorder %s67, %s81
    %p83 = scmp.eq.s32.totalorder %s15, 0
    %p84 = por %p82, %p83
    %s85 = ssub.s32 %s9, %s16
    %p86 = scmp.eq.s32.totalorder %s85, 0
    %s88 = sadd.s32 %s87, 1
    %s89 = scalar_select %p86, %s87, %s88
    %p92 = pneg %p86
    %p93 = scmp.eq.s32.totalorder %s9, 1
    %p94 = por %p92, %p93
    %p95 = scmp.ne.s32.totalorder %s87, %s90
    %p96 = scmp.eq.s32.totalorder %s9, 0
    %p97 = por %p95, %p96
    %p98 = scmp.ne.s32.totalorder %s87, %s90
    %p99 = scmp.eq.s32.totalorder %s14, 1
    %p100 = por %p98, %p99
    %p101 = scmp.ne.s32.totalorder %s90, %s91
    %p102 = scmp.eq.s32.totalorder %s14, 0
    %p103 = por %p101, %p102
    %p104 = scmp.ne.s32.totalorder %s90, %s91
    %p105 = scmp.eq.s32.totalorder %s15, 1
    %p106 = por %p104, %p105
    %p108 = scmp.ne.s32.totalorder %s91, %s107
    %p109 = scmp.eq.s32.totalorder %s15, 0
    %p110 = por %p108, %p109
    %p111 = scmp.le.s32.totalorder 1, %s9
    %p112 = scmp.lt.s32.totalorder %s9, 3
    %p113 = pnand %p111, %p112
    %p114 = pneg %p113
    // Predicated region
    $region9: #{tpu_custom_call.1} parent=5 // pred_check
      _
    $region10: #{tpu_custom_call.1} parent=5 // pred_check_branch
      %116 = sbr.rel (%p113) target = $region12
    $region11: #{tpu_custom_call.1} parent=5 // pred_region
      %s117 = ssub.s32 %s9, 1
      // Predicated region
      $region13: #{tpu_custom_call.1} parent=11 // pred_check
        %p118 = pneg %p56
      $region14: #{tpu_custom_call.1} parent=11 // pred_check_branch
        %120 = sbr.rel (%p118) target = $region16
      $region15: #{tpu_custom_call.1} parent=11 // pred_region
        _
      $region16: #{tpu_custom_call.1} parent=11 // pred_fallthru
        _
      // Predicated region
      $region17: #{tpu_custom_call.1} parent=11 // pred_check
        %p121 = pneg %p77
      $region18: #{tpu_custom_call.1} parent=11 // pred_check_branch
        %123 = sbr.rel (%p121) target = $region20
      $region19: #{tpu_custom_call.1} parent=11 // pred_region
        _
      $region20: #{tpu_custom_call.1} parent=11 // pred_fallthru
        _
    $region12: #{tpu_custom_call.1} parent=5 // pred_fallthru
      _
    %p124 = scmp.lt.s32.totalorder %s9, 2
    // Predicated region
    $region21: #{tpu_custom_call.1} parent=5 // pred_check
      %p125 = pneg %p124
    $region22: #{tpu_custom_call.1} parent=5 // pred_check_branch
      %127 = sbr.rel (%p125) target = $region24
    $region23: #{tpu_custom_call.1} parent=5 // pred_region
      // Predicated region
      $region25: #{tpu_custom_call.1} parent=23 // pred_check
        %p128 = pneg %p29
      $region26: #{tpu_custom_call.1} parent=23 // pred_check_branch
        %130 = sbr.rel (%p128) target = $region28
      $region27: #{tpu_custom_call.1} parent=23 // pred_region
        %p131 = scmp.lt.s32.totalorder %s9, 1
        %s132 = scalar_select %p131, %s9, 1
        %s133 = smul.addr %s132, 8
        %s134 = scalar_lea.vmem %s0, %s133
      $region28: #{tpu_custom_call.1} parent=23 // pred_fallthru
        _
    $region24: #{tpu_custom_call.1} parent=5 // pred_fallthru
      _
    %p135 = scmp.le.s32.totalorder 1, %s9
    %p136 = scmp.lt.s32.totalorder %s9, 3
    %p137 = pnand %p135, %p136
    %p138 = pneg %p137
    // Predicated region
    $region29: #{tpu_custom_call.1} parent=5 // pred_check
      _
    $region30: #{tpu_custom_call.1} parent=5 // pred_check_branch
      %140 = sbr.rel (%p137) target = $region32
    $region31: #{tpu_custom_call.1} parent=5 // pred_region
      %s141 = ssub.s32 %s9, 1
      %p142 = scmp.lt.s32.totalorder %s14, 1
      %s143 = scalar_select %p142, %s14, 1
      %s144 = smul.addr %s143, 8
      %s145 = scalar_lea.vmem %s0, %s144
      %p146 = pneg %p35
      %p147 = pneg %p32
      %p148 = pneg %p56
      %p149 = pneg %p53
      %p150 = pneg %p77
      %p151 = pneg %p74
      %p152 = pneg %p103
      %p153 = pneg %p100
      %p154 = scmp.lt.s32.totalorder %s14, 1
      %s155 = scalar_select %p154, %s14, 1
      %s156 = smul.addr %s155, 8
      %s157 = scalar_lea.vmem %s3, %s156
      %p158 = scmp.lt.s32.totalorder %s14, 1
      %s159 = scalar_select %p158, %s14, 1
      %s160 = smul.addr %s159, 8
      %s161 = scalar_lea.vmem %s0, %s160
      %p162 = scmp.lt.s32.totalorder %s14, 1
      %s163 = scalar_select %p162, %s14, 1
      %s164 = smul.addr %s163, 8
      %s165 = scalar_lea.vmem %s3, %s164
      %v166 = vld [vmem:[%s161] sm:$0xff]
      %v167 = vld [vmem:[%s1] sm:$0xff]
      %v168 = vld [vmem:[%s1 + $0x8] sm:$0xff]
      %v169 = vld [vmem:[%s1 + $0x10] sm:$0xff]
      %v170 = vld [vmem:[%s1 + $0x18] sm:$0xff]
      %v171 = vld [vmem:[%s2] sm:$0x1]
      %v173 = vlaneseq
      %v174 = vshrl.u32 %v173, 7
      %v175 = vsub.s32 0, %v174
      %v176 = vrot.slane %v171, %v175
      %vm178 = vcmask 261120
      %v180 = vsel %vm178, %v166, 0
      %182 = vmatprep.subr.mxu0 0.0
      %183 = vmatpush1.msra.mxu0 0.0
      %184 = vmatprep.subr.mxu0 0.0
      %185 = vmatpush1.msra.mxu0 0.0
      %186 = vmatprep.subr.mxu0 0.0
      %187 = vmatpush1.msra.mxu0 0.0
      %188 = vmatprep.subr.mxu0 0.0
      %189 = vmatpush1.msra.mxu0 0.0
      %190 = vmatprep.subr.mxu0 0.0
      %191 = vmatpush1.msra.mxu0 0.0
      %192 = vmatprep.subr.mxu0 0.0
      %193 = vmatpush1.msra.mxu0 0.0
      %194 = vmatprep.subr.mxu0 0.0
      %195 = vmatpush1.msra.mxu0 0.0
      %196 = vmatprep.subr.mxu0 0.0
      %197 = vmatpush1.msra.mxu0 0.0
      %198 = vmatprep.subr.mxu0 0.0
      %199 = vmatpush1.msra.mxu0 0.0
      %200 = vmatprep.subr.mxu0 0.0
      %201 = vmatpush1.msra.mxu0 0.0
      %202 = vmatprep.subr.mxu0 0.0
      %203 = vmatpush1.msra.mxu0 0.0
      %204 = vmatprep.subr.mxu0 0.0
      %205 = vmatpush1.msra.mxu0 0.0
      %206 = vmatprep.subr.mxu0 0.0
      %207 = vmatpush1.msra.mxu0 %v170
      %208 = vmatprep.subr.mxu0 0.0
      %209 = vmatpush1.msra.mxu0 %v169
      %210 = vmatprep.subr.mxu0 0.0
      %211 = vmatpush1.msra.mxu0 %v168
      %212 = vmatprep.subr.mxu0 0.0
      %213 = vmatpush1.msra.mxu0 %v167
      %214 = vmatprep.subr.mxu0 0.0
      %215 = vmatpush2.msra.mxu0 0.0
      %216 = vmatprep.subr.mxu0 0.0
      %217 = vmatpush2.msra.mxu0 0.0
      %218 = vmatprep.subr.mxu0 0.0
      %219 = vmatpush2.msra.mxu0 0.0
      %220 = vmatprep.subr.mxu0 0.0
      %221 = vmatpush2.msra.mxu0 0.0
      %222 = vmatprep.subr.mxu0 0.0
      %223 = vmatpush2.msra.mxu0 0.0
      %224 = vmatprep.subr.mxu0 0.0
      %225 = vmatpush2.msra.mxu0 0.0
      %226 = vmatprep.subr.mxu0 0.0
      %227 = vmatpush2.msra.mxu0 0.0
      %228 = vmatprep.subr.mxu0 0.0
      %229 = vmatpush2.msra.mxu0 0.0
      %230 = vmatprep.subr.mxu0 0.0
      %231 = vmatpush2.msra.mxu0 0.0
      %232 = vmatprep.subr.mxu0 0.0
      %233 = vmatpush2.msra.mxu0 0.0
      %234 = vmatprep.subr.mxu0 0.0
      %235 = vmatpush2.msra.mxu0 0.0
      %236 = vmatprep.subr.mxu0 0.0
      %237 = vmatpush2.msra.mxu0 0.0
      %238 = vmatprep.subr.mxu0 0.0
      %239 = vmatpush2.msra.mxu0 0.0
      %240 = vmatprep.subr.mxu0 0.0
      %241 = vmatpush2.msra.mxu0 0.0
      %242 = vmatprep.subr.mxu0 0.0
      %243 = vmatpush2.msra.mxu0 0.0
      %244 = vmatprep.subr.mxu0 0.0
      %245 = vmatpush2.msra.mxu0 0.0
      %246 = vmatprep.mubr.f32.mxu0 0.0
      %247 = vmatmul.mubr.f32.gmra.mxu0 %v180
      %v248 = vpop.f32.mrf.mxu0
      %v249 = vadd.f32 %v176, %v248
      %v250 = vpop.f32.mrf.mxu0
      %251 = vdwg.mxu0
      %vm252 = vcmask 31744
      %253 = vst.msk [vmem:[%s165] sm:$0xff] %vm252, %v249
      %p254 = scmp.lt.s32.totalorder %s14, 1
      %s255 = scalar_select %p254, %s14, 1
      %s256 = smul.addr %s255, 8
      %s257 = scalar_lea.vmem %s3, %s256
      // Predicated region
      $region33: #{tpu_custom_call.1} parent=31 // pred_check
        %p258 = pneg %p100
      $region34: #{tpu_custom_call.1} parent=31 // pred_check_branch
        %260 = sbr.rel (%p258) target = $region36
      $region35: #{tpu_custom_call.1} parent=31 // pred_region
        _
      $region36: #{tpu_custom_call.1} parent=31 // pred_fallthru
        _
    $region32: #{tpu_custom_call.1} parent=5 // pred_fallthru
      _
    %p261 = scmp.le.s32.totalorder 2, %s9
    // Predicated region
    $region37: #{tpu_custom_call.1} parent=5 // pred_check
      %p262 = pneg %p261
    $region38: #{tpu_custom_call.1} parent=5 // pred_check_branch
      %264 = sbr.rel (%p262) target = $region40
    $region39: #{tpu_custom_call.1} parent=5 // pred_region
      %s265 = ssub.s32 %s9, 2
      // Predicated region
      $region41: #{tpu_custom_call.1} parent=39 // pred_check
        %p266 = pneg %p106
      $region42: #{tpu_custom_call.1} parent=39 // pred_check_branch
        %268 = sbr.rel (%p266) target = $region44
      $region43: #{tpu_custom_call.1} parent=39 // pred_region
        %p269 = scmp.lt.s32.totalorder %s15, 1
        %s270 = scalar_select %p269, %s15, 1
        %s271 = smul.addr %s270, 8
        %s272 = scalar_lea.vmem %s3, %s271
      $region44: #{tpu_custom_call.1} parent=39 // pred_fallthru
        _
    $region40: #{tpu_custom_call.1} parent=5 // pred_fallthru
      _
  $region6: #{tpu_custom_call.1} parent=0 // loop_footer
    %s13 = sadd.s32 1, %s9
  $region7: #{tpu_custom_call.1} parent=0 // loop_footer_branch
    %8 = sbr.rel target = $region3
  $region8: #{tpu_custom_call.1} parent=0 // loop_exit
    _

</llo_original>
